<compile_context>
chip_gen: v7x
topology: tpu7x:2x2x1
jax: 0.10.0
libtpu: 0.0.40
codegen_flags: <defaults>
</compile_context>

<pallas_src>
import functools

import jax
import jax.numpy as jnp
from jax.experimental import pallas as pl
from jax.experimental.pallas import tpu as pltpu


def _softplus(x):
    # stable softplus(x) == -log(sigmoid(-x)); exp/log1p are EUP ops
    return jnp.maximum(x, 0.0) + jnp.log1p(jnp.exp(-jnp.abs(x)))


def _round_up(x, m):
    return ((x + m - 1) // m) * m


def _partial_sum_store(out_ref, contrib, *, axis, offset, n_valid, mask_needed):
    """Sum `contrib`, masking grid-padding entries along `axis` (last tile only),
    and broadcast-store the scalar into this grid step's partial-sum block."""

    def _store(val):
        out_ref[...] = jnp.broadcast_to(val, out_ref.shape).astype(out_ref.dtype)

    if not mask_needed:                       # rows % tile == 0: no mask at all
        _store(jnp.sum(contrib))
    else:
        i = pl.program_id(0)
        last = pl.num_programs(0) - 1

        @pl.when(i != last)
        def _():
            _store(jnp.sum(contrib))

        @pl.when(i == last)
        def _():
            idx = jax.lax.broadcasted_iota(jnp.int32, contrib.shape, axis) + offset
            _store(jnp.sum(jnp.where(idx < n_valid, contrib, 0.0)))


def _packed_kernel(sel_ref, q_ref, k_ref, t_ref, out_ref, *,
                   n_valid_rows, mask_needed):
    """Lane-dense path: each packed row holds `pack` original rows of width d."""
    tile = q_ref.shape[0]
    q = q_ref[...].astype(jnp.float32)          # (tile, 128), lane-dense
    k = k_ref[...].astype(jnp.float32)          # (tile, 128)
    prod = q * k                                # (tile, 128)

    # Block-diagonal selector reduce on the MXU: (pack,128) x (tile,128)^T
    # -> (pack, tile) per-row dots; output stays lane-dense for the epilogue.
    dots = jax.lax.dot_general(
        sel_ref[...], prod,
        dimension_numbers=(((1,), (1,)), ((), ())),
        preferred_element_type=jnp.float32)     # (pack, tile)

    # -log(sigmoid(x)) == softplus(-x)
    contrib = _softplus(-dots) * t_ref[...].astype(jnp.float32)   # (pack, tile)

    _partial_sum_store(out_ref, contrib, axis=1,
                       offset=pl.program_id(0) * tile,
                       n_valid=n_valid_rows, mask_needed=mask_needed)


def _rowdot_kernel(q_ref, k_ref, t_ref, out_ref, *, n_valid_rows, mask_needed):
    """Generic path (D >= 128 or D not dividing 128)."""
    tile = q_ref.shape[0]
    q = q_ref[...].astype(jnp.float32)          # (tile, D)
    k = k_ref[...].astype(jnp.float32)          # (tile, D)
    rst = jnp.sum(q * k, axis=-1, keepdims=True)        # (tile, 1)
    contrib = _softplus(-rst) * t_ref[...].astype(jnp.float32)

    _partial_sum_store(out_ref, contrib, axis=0,
                       offset=pl.program_id(0) * tile,
                       n_valid=n_valid_rows, mask_needed=mask_needed)


def myloss(query, key, target, *, max_tile_rows=None):
    """query, key: (N, D); target: any shape with N elements. Returns scalar.

    query/key may be fed as bf16 to halve HBM traffic; the kernel upcasts.
    `max_tile_rows` is a test-only override to force multi-block tiling.
    """
    n, d = query.shape
    assert key.shape == (n, d)
    target = jnp.reshape(target, (-1,))         # target.view(-1)
    assert target.shape[0] == n

    if d < 128 and 128 % d == 0:
        # ---- lane-dense packing: pack rows into the 128-lane dimension ----
        pack = 128 // d
        n_pad = _round_up(n, pack)
        if n_pad != n:
            # zero rows contribute softplus(0) * 0 == 0 to the sum
            query = jnp.pad(query, ((0, n_pad - n), (0, 0)))
            key = jnp.pad(key, ((0, n_pad - n), (0, 0)))
            target = jnp.pad(target, (0, n_pad - n))
        rows = n_pad // pack
        # TODO(synk): this reshape may materialize an HBM relayout copy if the
        # producer stores (N, d) lane-padded; ideally upstream emits lane-dense
        # (rows, 128) activations directly.
        q_in = jnp.reshape(query, (rows, 128))
        k_in = jnp.reshape(key, (rows, 128))
        t_in = jnp.transpose(jnp.reshape(target, (rows, pack)))    # (pack, rows)
        # hoisted block-diagonal selector: lanes [g*d,(g+1)*d) -> group g
        sel = (jnp.arange(128)[None, :] // d
               == jnp.arange(pack)[:, None]).astype(jnp.float32)   # (pack, 128)
        feat = 128
        align = 128     # multiple of 128: lane-dense t blocks + any-dtype sublane
        packed = True
    else:
        rows = n
        q_in, k_in = query, key
        t_in = jnp.reshape(target, (n, 1))
        feat = d
        min_item = min(q_in.dtype.itemsize, k_in.dtype.itemsize)
        align = max(8, 8 * (4 // max(1, min_item)))   # 8 f32 / 16 bf16 / 32 int8
        packed = False

    # ---- tile sizing: 2 pipeline buffers x tile x (q_row + k_row) <= ~16 MiB
    row_bytes = feat * (q_in.dtype.itemsize + k_in.dtype.itemsize)
    max_tile = max(align, min((16 * 1024 * 1024) // (2 * row_bytes), 8192))
    if max_tile_rows is not None:
        max_tile = max_tile_rows

    if rows <= max_tile:
        tile = rows                         # single block; block dims == array dims
    else:
        ngrid = pl.cdiv(rows, max_tile)
        if ngrid % 2:
            ngrid += 1                      # v7x: even grid -> both TCs balanced
        tile = _round_up(pl.cdiv(rows, ngrid), align)
        if tile >= rows:
            tile = rows
    grid_n = pl.cdiv(rows, tile)
    mask_needed = (rows % tile) != 0

    if packed:
        kernel = functools.partial(_packed_kernel, n_valid_rows=rows,
                                   mask_needed=mask_needed)
        in_specs = [
            pl.BlockSpec((pack, 128), lambda i: (0, 0)),   # sel: VMEM-resident
            pl.BlockSpec((tile, 128), lambda i: (i, 0)),
            pl.BlockSpec((tile, 128), lambda i: (i, 0)),
            pl.BlockSpec((pack, tile), lambda i: (0, i)),
        ]
        args = (sel, q_in, k_in, t_in)
    else:
        kernel = functools.partial(_rowdot_kernel, n_valid_rows=rows,
                                   mask_needed=mask_needed)
        in_specs = [
            pl.BlockSpec((tile, feat), lambda i: (i, 0)),
            pl.BlockSpec((tile, feat), lambda i: (i, 0)),
            pl.BlockSpec((tile, 1), lambda i: (i, 0)),
        ]
        args = (q_in, k_in, t_in)

    partials = pl.pallas_call(
        kernel,
        out_shape=jax.ShapeDtypeStruct((grid_n, 8, 128), jnp.float32),
        grid_spec=pltpu.PrefetchScalarGridSpec(
            num_scalar_prefetch=0,
            grid=(grid_n,),
            in_specs=in_specs,
            out_specs=pl.BlockSpec((1, 8, 128), lambda i: (i, 0, 0)),
        ),
        compiler_params=pltpu.CompilerParams(
            dimension_semantics=("parallel",),      # megacore-shardable on v7x
            vmem_limit_bytes=48 * 1024 * 1024,
        ),
    )(*args)

    # tiny finalize outside the kernel: sum per-tile partials, divide by N
    return jnp.sum(partials[:, 0, 0]) / jnp.float32(n)


def myloss_ref(query, key, target):
    target = target.reshape(-1)
    rst = jnp.einsum("ij,ij->i", query, key)
    log_rst = -jnp.log(jax.nn.sigmoid(rst))
    return jnp.mean(log_rst * target)


if __name__ == "__main__":
    # Myloss has no learnable parameters.
    # TODO(synk): self.MSE (torch.nn.MSELoss) is never used in forward; omitted.
    N, D = 128, 32
    k0, k1, k2 = jax.random.split(jax.random.PRNGKey(0), 3)
    query = jax.random.normal(k0, (N, D), dtype=jnp.float32)
    key = jax.random.normal(k1, (N, D), dtype=jnp.float32)
    target = jax.random.uniform(k2, (N,), dtype=jnp.float32)

    loss = jax.block_until_ready(myloss(query, key, target))
    ref = jax.block_until_ready(myloss_ref(query, key, target))
    assert jnp.allclose(loss, ref, rtol=1e-5, atol=1e-5), (loss, ref)

    # generic (D >= 128) path
    q2 = jax.random.normal(k0, (100, 256), dtype=jnp.float32)
    kk2 = jax.random.normal(k1, (100, 256), dtype=jnp.float32)
    t2 = jax.random.uniform(k2, (100,), dtype=jnp.float32)
    l2 = jax.block_until_ready(myloss(q2, kk2, t2))
    assert jnp.allclose(l2, myloss_ref(q2, kk2, t2), rtol=1e-5, atol=1e-5)

    # ragged-N packed path (N not a multiple of the packing factor)
    q3 = jax.random.normal(k1, (50, 32), dtype=jnp.float32)
    kk3 = jax.random.normal(k2, (50, 32), dtype=jnp.float32)
    t3 = jax.random.uniform(k0, (50,), dtype=jnp.float32)
    l3 = jax.block_until_ready(myloss(q3, kk3, t3))
    assert jnp.allclose(l3, myloss_ref(q3, kk3, t3), rtol=1e-5, atol=1e-5)

    # multi-tile grid + last-tile mask path (force small tiles for coverage)
    q4 = jax.random.normal(k2, (2000, 32), dtype=jnp.float32)
    kk4 = jax.random.normal(k0, (2000, 32), dtype=jnp.float32)
    t4 = jax.random.uniform(k1, (2000,), dtype=jnp.float32)
    l4 = jax.block_until_ready(myloss(q4, kk4, t4, max_tile_rows=128))
    assert jnp.allclose(l4, myloss_ref(q4, kk4, t4), rtol=1e-5, atol=1e-5)

    # bf16 inputs (halved HBM traffic; kernel upcasts to f32)
    qb = query.astype(jnp.bfloat16)
    kb = key.astype(jnp.bfloat16)
    lb = jax.block_until_ready(myloss(qb, kb, target))
    rb = myloss_ref(qb.astype(jnp.float32), kb.astype(jnp.float32), target)
    assert jnp.allclose(lb, rb, rtol=1e-4, atol=1e-4), (lb, rb)

    print("KERNEL_OK")
</pallas_src>

<mosaic_0001>
module attributes {stable_mosaic.version = 11 : i64} {
  func.func @_packed_kernel(%arg0: i32, %arg1: memref<4x128xf32, #tpu.memory_space<vmem>>, %arg2: memref<32x128xf32, #tpu.memory_space<vmem>>, %arg3: memref<32x128xf32, #tpu.memory_space<vmem>>, %arg4: memref<4x32xf32, #tpu.memory_space<vmem>>, %arg5: memref<1x8x128xf32, #tpu.memory_space<vmem>>) attributes {dimension_semantics = [#tpu.dimension_semantics<parallel>], iteration_bounds = array<i64: 1>, scalar_prefetch = 0 : i64, scratch_operands = 0 : i64, tpu.core_type = #tpu.core_type<tc>, window_params = [{pipeline_mode = #tpu.pipeline_mode<synchronous>, transform_indices = @transform_0, window_bounds = array<i64: 4, 128>}, {transform_indices = @transform_1, window_bounds = array<i64: 32, 128>}, {transform_indices = @transform_2, window_bounds = array<i64: 32, 128>}, {transform_indices = @transform_3, window_bounds = array<i64: 4, 32>}, {transform_indices = @transform_4, window_bounds = array<i64: 1, 8, 128>}]} {
    %c0 = arith.constant 0 : index
    %c0_0 = arith.constant 0 : index
    %0 = vector.load %arg2[%c0, %c0_0] : memref<32x128xf32, #tpu.memory_space<vmem>>, vector<32x128xf32>
    %c0_1 = arith.constant 0 : index
    %c0_2 = arith.constant 0 : index
    %1 = vector.load %arg3[%c0_1, %c0_2] : memref<32x128xf32, #tpu.memory_space<vmem>>, vector<32x128xf32>
    %2 = arith.mulf %0, %1 : vector<32x128xf32>
    %c0_3 = arith.constant 0 : index
    %c0_4 = arith.constant 0 : index
    %3 = vector.load %arg1[%c0_3, %c0_4] : memref<4x128xf32, #tpu.memory_space<vmem>>, vector<4x128xf32>
    %cst = arith.constant dense<0.000000e+00> : vector<4x32xf32>
    %4 = tpu.matmul %3, %2, %cst {dimension_numbers = #tpu.dot_dimension_numbers<[1], [1], [0], [0], [0, 0, 1, 0], [], []>} : vector<4x128xf32>, vector<32x128xf32>, vector<4x32xf32> -> vector<4x32xf32>
    %cst_5 = arith.constant 0.000000e+00 : f32
    %5 = vector.broadcast %cst_5 : f32 to vector<4x32xf32>
    %6 = arith.subf %5, %4 : vector<4x32xf32>
    %cst_6 = arith.constant 0.000000e+00 : f32
    %7 = vector.broadcast %cst_6 : f32 to vector<4x32xf32>
    %8 = arith.maximumf %6, %7 : vector<4x32xf32>
    %9 = math.absf %6 : vector<4x32xf32>
    %cst_7 = arith.constant 0.000000e+00 : f32
    %10 = vector.broadcast %cst_7 : f32 to vector<4x32xf32>
    %11 = arith.subf %10, %9 : vector<4x32xf32>
    %12 = math.exp %11 : vector<4x32xf32>
    %13 = math.log1p %12 : vector<4x32xf32>
    %14 = arith.addf %8, %13 : vector<4x32xf32>
    %c0_8 = arith.constant 0 : index
    %c0_9 = arith.constant 0 : index
    %15 = vector.load %arg4[%c0_8, %c0_9] : memref<4x32xf32, #tpu.memory_space<vmem>>, vector<4x32xf32>
    %16 = arith.mulf %14, %15 : vector<4x32xf32>
    %17 = vector.shape_cast %16 : vector<4x32xf32> to vector<1x4x32xf32>
    %cst_10 = arith.constant dense<0.000000e+00> : vector<1xf32>
    %18 = vector.multi_reduction <add>, %17, %cst_10 [1, 2] : vector<1x4x32xf32> to vector<1xf32>
    %19 = vector.shape_cast %18 : vector<1xf32> to vector<1x1x1xf32>
    %20 = vector.extract %19[0, 0, 0] : f32 from vector<1x1x1xf32>
    %21 = vector.broadcast %20 : f32 to vector<1x8x128xf32>
    %c0_11 = arith.constant 0 : index
    %c0_12 = arith.constant 0 : index
    %c0_13 = arith.constant 0 : index
    %22 = vector.load %arg5[%c0_11, %c0_12, %c0_13] : memref<1x8x128xf32, #tpu.memory_space<vmem>>, vector<1x8x128xf32>
    tpu.vector_store %arg5[%c0_11, %c0_12, %c0_13], %21 {strides = array<i32>} : memref<1x8x128xf32, #tpu.memory_space<vmem>>, vector<1x8x128xf32>,
    return
  }
  func.func @transform_0(%arg0: i32) -> (i32, i32) {
    %c0_i32 = arith.constant 0 : i32
    %c0_i32_0 = arith.constant 0 : i32
    %c0_i32_1 = arith.constant 0 : i32
    return %c0_i32, %c0_i32_0 : i32, i32
  }
  func.func @transform_1(%arg0: i32) -> (i32, i32) {
    %c0_i32 = arith.constant 0 : i32
    %c0_i32_0 = arith.constant 0 : i32
    return %arg0, %c0_i32 : i32, i32
  }
  func.func @transform_2(%arg0: i32) -> (i32, i32) {
    %c0_i32 = arith.constant 0 : i32
    %c0_i32_0 = arith.constant 0 : i32
    return %arg0, %c0_i32 : i32, i32
  }
  func.func @transform_3(%arg0: i32) -> (i32, i32) {
    %c0_i32 = arith.constant 0 : i32
    %c0_i32_0 = arith.constant 0 : i32
    return %c0_i32, %arg0 : i32, i32
  }
  func.func @transform_4(%arg0: i32) -> (i32, i32, i32) {
    %c0_i32 = arith.constant 0 : i32
    %c0_i32_0 = arith.constant 0 : i32
    %c0_i32_1 = arith.constant 0 : i32
    return %arg0, %c0_i32, %c0_i32_0 : i32, i32, i32
  }
}

</mosaic_0001>

<llo_original>
// kernel: tpu_custom_call.1
$region0: #{tpu_custom_call.1}
  #allocation0 [shape = 'u32[]', space=smem, size = 0x4, offset = 0x4, fixed_abs, tag = 'smem constant byte address 0x4 - core index']
  #allocation1 [shape = 'u32[144,128]{1,0:T(1,128)}', space=vmem, size = 0x12000, scoped, tag = 'internal scratch']
  %s0 = inlined_call_operand.hbm [shape: f32[4,128], index: 0, kind: input, shape index: {}]
  %s1 = inlined_call_operand.hbm [shape: f32[32,128], index: 1, kind: input, shape index: {}]
  %s2 = inlined_call_operand.hbm [shape: f32[32,128], index: 2, kind: input, shape index: {}]
  %s3 = inlined_call_operand.vmem [shape: f32[4,32], index: 3, kind: input, shape index: {}]
  %s4 = inlined_call_operand.hbm [shape: f32[1,8,128], index: 4, kind: output, shape index: {}]
  %s5 = sld [smem:[#allocation0]]
  $region38: #{tpu_custom_call.1} parent=0
    _
  %s7 = ssub.s32 1, %s5
  %s8 = scalar_select 0, %s7, %s5
  $region1: #{tpu_custom_call.1} parent=0
    #allocation2 [shape = 'u8[2048]{0}', space=vmem, size = 0x800, scoped, tag = 'input window, operand 0, single buffered']
    #allocation3 [shape = 's32[1]{0}', space=sflag, size = 0x4, scoped, tag = 'scoped memory for tpu_custom_call.1']
    #allocation4 [shape = 's32[1]{0}', space=sflag, size = 0x4, scoped, tag = 'scoped memory for tpu_custom_call.1']
    #allocation5 [shape = 'u8[16384]{0}', space=vmem, size = 0x4000, scoped, tag = 'input window, operand 1, single buffered']
    #allocation6 [shape = 's32[1]{0}', space=sflag, size = 0x4, scoped, tag = 'scoped memory for tpu_custom_call.1']
    #allocation7 [shape = 'u8[16384]{0}', space=vmem, size = 0x4000, scoped, tag = 'input window, operand 2, single buffered']
    #allocation8 [shape = 'u8[4096]{0}', space=vmem, size = 0x1000, scoped, tag = 'output window, operand 0, single buffered']
    %9 = vsyncpa [#allocation3], 0
    %10 = vsyncpa [#allocation6], 0
    %11 = vsyncpa [#allocation4], 0
    // Predicated region
    $region2: #{tpu_custom_call.1} parent=1 // pred_check
      _
    $region3: #{tpu_custom_call.1} parent=1 // pred_check_branch
      %13 = sbr.rel (0) target = $region5
    $region4: #{tpu_custom_call.1} parent=1 // pred_region
      %s15 = ssub.s32 64, 64
      %16 = vsyncadd [#allocation3], %s15
      %s18 = sshll.u32 [#allocation2], 4
      %s19 = int_to_ptr.vmem [resolvable:$true] %s18
      %21 = dma.hbm_to_vmem [thread:$0]  %s0, 64, %s19, [#allocation3]
    $region5: #{tpu_custom_call.1} parent=1 // pred_fallthru
      _
    // Predicated region
    $region6: #{tpu_custom_call.1} parent=1 // pred_check
      _
    $region7: #{tpu_custom_call.1} parent=1 // pred_check_branch
      %23 = sbr.rel (0) target = $region9
    $region8: #{tpu_custom_call.1} parent=1 // pred_region
      %s25 = ssub.s32 512, 512
      %26 = vsyncadd [#allocation6], %s25
      %s27 = sshll.u32 [#allocation5], 4
      %s28 = int_to_ptr.vmem [resolvable:$true] %s27
      %33 = dma.hbm_to_vmem [thread:$0]  %s1, 512, %s28, [#allocation6], 128, 128, 8
    $region9: #{tpu_custom_call.1} parent=1 // pred_fallthru
      _
    // Predicated region
    $region10: #{tpu_custom_call.1} parent=1 // pred_check
      _
    $region11: #{tpu_custom_call.1} parent=1 // pred_check_branch
      %35 = sbr.rel (0) target = $region13
    $region12: #{tpu_custom_call.1} parent=1 // pred_region
      %s37 = ssub.s32 512, 512
      %38 = vsyncadd [#allocation6], %s37
      %s39 = sshll.u32 [#allocation7], 4
      %s40 = int_to_ptr.vmem [resolvable:$true] %s39
      %45 = dma.hbm_to_vmem [thread:$0]  %s2, 512, %s40, [#allocation6], 128, 128, 8
    $region13: #{tpu_custom_call.1} parent=1 // pred_fallthru
      _
    // Predicated region
    $region14: #{tpu_custom_call.1} parent=1 // pred_check
      _
    $region15: #{tpu_custom_call.1} parent=1 // pred_check_branch
      %47 = sbr.rel (0) target = $region17
    $region16: #{tpu_custom_call.1} parent=1 // pred_region
      _
    $region17: #{tpu_custom_call.1} parent=1 // pred_fallthru
      _
    // Predicated region
    $region18: #{tpu_custom_call.1} parent=1 // pred_check
      _
    $region19: #{tpu_custom_call.1} parent=1 // pred_check_branch
      %49 = sbr.rel (0) target = $region21
    $region20: #{tpu_custom_call.1} parent=1 // pred_region
      %50 = dma.done [#allocation3], 64
    $region21: #{tpu_custom_call.1} parent=1 // pred_fallthru
      _
    // Predicated region
    $region22: #{tpu_custom_call.1} parent=1 // pred_check
      _
    $region23: #{tpu_custom_call.1} parent=1 // pred_check_branch
      %52 = sbr.rel (0) target = $region25
    $region24: #{tpu_custom_call.1} parent=1 // pred_region
      %53 = dma.done [#allocation6], 512
    $region25: #{tpu_custom_call.1} parent=1 // pred_fallthru
      _
    // Predicated region
    $region26: #{tpu_custom_call.1} parent=1 // pred_check
      _
    $region27: #{tpu_custom_call.1} parent=1 // pred_check_branch
      %55 = sbr.rel (0) target = $region29
    $region28: #{tpu_custom_call.1} parent=1 // pred_region
      %56 = dma.done [#allocation6], 512
    $region29: #{tpu_custom_call.1} parent=1 // pred_fallthru
      _
    %v57 = vld [vmem:[#allocation5] sm:$0xff]
    %v58 = vld [vmem:[#allocation5 + $0x8] sm:$0xff]
    %v59 = vld [vmem:[#allocation5 + $0x10] sm:$0xff]
    %v60 = vld [vmem:[#allocation5 + $0x18] sm:$0xff]
    %v61 = vld [vmem:[#allocation7] sm:$0xff]
    %v62 = vld [vmem:[#allocation7 + $0x8] sm:$0xff]
    %v63 = vld [vmem:[#allocation7 + $0x10] sm:$0xff]
    %v64 = vld [vmem:[#allocation7 + $0x18] sm:$0xff]
    %v65 = vmul.f32 %v57, %v61
    %v66 = vmul.f32 %v58, %v62
    %v67 = vmul.f32 %v59, %v63
    %v68 = vmul.f32 %v60, %v64
    %v69 = vld [vmem:[#allocation2] sm:$0xf]
    %70 = vmatprep.subr.mxu0 0.0
    %71 = vmatpush1.xpose.msra.mxu0 %v65
    %72 = vmatprep.subr.mxu0 0.0
    %73 = vmatpush1.xpose.msra.mxu0 %v66
    %74 = vmatprep.subr.mxu0 0.0
    %75 = vmatpush1.xpose.msra.mxu0 %v67
    %76 = vmatprep.subr.mxu0 0.0
    %77 = vmatpush1.xpose.msra.mxu0 %v68
    %78 = vmatprep.subr.mxu0 0.0
    %79 = vmatpush1.xpose.msra.mxu0 0.0
    %80 = vmatprep.subr.mxu0 0.0
    %81 = vmatpush1.xpose.msra.mxu0 0.0
    %82 = vmatprep.subr.mxu0 0.0
    %83 = vmatpush1.xpose.msra.mxu0 0.0
    %84 = vmatprep.subr.mxu0 0.0
    %85 = vmatpush1.xpose.msra.mxu0 0.0
    %86 = vmatprep.subr.mxu0 0.0
    %87 = vmatpush1.xpose.msra.mxu0 0.0
    %88 = vmatprep.subr.mxu0 0.0
    %89 = vmatpush1.xpose.msra.mxu0 0.0
    %90 = vmatprep.subr.mxu0 0.0
    %91 = vmatpush1.xpose.msra.mxu0 0.0
    %92 = vmatprep.subr.mxu0 0.0
    %93 = vmatpush1.xpose.msra.mxu0 0.0
    %94 = vmatprep.subr.mxu0 0.0
    %95 = vmatpush1.xpose.msra.mxu0 0.0
    %96 = vmatprep.subr.mxu0 0.0
    %97 = vmatpush1.xpose.msra.mxu0 0.0
    %98 = vmatprep.subr.mxu0 0.0
    %99 = vmatpush1.xpose.msra.mxu0 0.0
    %100 = vmatprep.subr.mxu0 0.0
    %101 = vmatpush1.xpose.msra.mxu0 0.0
    %102 = vmatprep.subr.mxu0 0.0
    %103 = vmatpush1.xpose.msra.mxu0 0.0
    %104 = vmatprep.subr.mxu0 0.0
    %105 = vmatpush1.xpose.msra.mxu0 0.0
    %106 = vmatprep.subr.mxu0 0.0
    %107 = vmatpush1.xpose.msra.mxu0 0.0
    %108 = vmatprep.subr.mxu0 0.0
    %109 = vmatpush1.xpose.msra.mxu0 0.0
    %110 = vmatprep.subr.mxu0 0.0
    %111 = vmatpush1.xpose.msra.mxu0 0.0
    %112 = vmatprep.subr.mxu0 0.0
    %113 = vmatpush1.xpose.msra.mxu0 0.0
    %114 = vmatprep.subr.mxu0 0.0
    %115 = vmatpush1.xpose.msra.mxu0 0.0
    %116 = vmatprep.subr.mxu0 0.0
    %117 = vmatpush1.xpose.msra.mxu0 0.0
    %118 = vmatprep.subr.mxu0 0.0
    %119 = vmatpush1.xpose.msra.mxu0 0.0
    %120 = vmatprep.subr.mxu0 0.0
    %121 = vmatpush1.xpose.msra.mxu0 0.0
    %122 = vmatprep.subr.mxu0 0.0
    %123 = vmatpush1.xpose.msra.mxu0 0.0
    %124 = vmatprep.subr.mxu0 0.0
    %125 = vmatpush1.xpose.msra.mxu0 0.0
    %126 = vmatprep.subr.mxu0 0.0
    %127 = vmatpush1.xpose.msra.mxu0 0.0
    %128 = vmatprep.subr.mxu0 0.0
    %129 = vmatpush1.xpose.msra.mxu0 0.0
    %130 = vmatprep.subr.mxu0 0.0
    %131 = vmatpush1.xpose.msra.mxu0 0.0
    %132 = vmatprep.subr.mxu0 0.0
    %133 = vmatpush1.xpose.msra.mxu0 0.0
    %134 = vmatprep.mubr.f32.mxu0 0.0
    %135 = vmatmul.mubr.f32.gmra.mrb[0].mxu0 %v69
    %v136 = vpop.f32.mrb[0].mxu0
    %v137 = vadd.f32 0.0, %v136
    %v138 = vpop.f32.mrb[0].mxu0
    %139 = vdwg.mxu0
    %v140 = vsub.f32 0.0, %v137
    %v141 = vmax.f32 %v140, 0.0
    %v142 = vand.u32 2147483647, %v140
    %v143 = vsub.f32 0.0, %v142
    %v144 = vmul.f32 %v143, 1.442695
    %v145 = vpow.pop %v144
    %v146 = vadd.f32 %v145, 1.0
    %v147 = vlog2.pop %v146
    %v148 = vmul.f32 %v147, 0.6931472
    %v149 = vmul.f32 -0.5, %v145
    %v150 = vadd.f32 %v149, 1.0
    %v151 = vmul.f32 %v150, %v145
    %v152 = vand.u32 2147483647, %v145
    %vm153 = vcmp.lt.f32.partialorder %v152, 0.0004427343
    %v154 = vsel %vm153, %v151, %v148
    %v155 = vadd.f32 %v141, %v154
    %v156 = vld [vmem:[%s3] sm:$0xf]
    %v157 = vmul.f32 %v155, %v156
    %vm158 = vcmask 257024
    %v159 = vsel %vm158, %v157, 0.0
    %160 = vadd.xlane.f32.xlu0 %v159
    %v161 = vpop.xlane.xlu0 %160
    %v162 = vrot.slane %v161, 4
    %v163 = vadd.f32 %v161, %v162
    %v164 = vrot.slane %v163, 2
    %v165 = vadd.f32 %v163, %v164
    %v166 = vrot.slane %v165, 1
    %v167 = vadd.f32 %v165, %v166
    %s168 = vtos %v167
    %v169 = vstv %s168
    %170 = vst [vmem:[#allocation8] sm:$0xff] %v169
    // Predicated region
    $region30: #{tpu_custom_call.1} parent=1 // pred_check
      _
    $region31: #{tpu_custom_call.1} parent=1 // pred_check_branch
      %172 = sbr.rel (0) target = $region33
    $region32: #{tpu_custom_call.1} parent=1 // pred_region
      %s174 = ssub.s32 128, 128
      %175 = vsyncadd [#allocation4], %s174
      %s177 = sshll.u32 [#allocation8], 4
      %s178 = int_to_ptr.vmem [resolvable:$true] %s177
      %180 = dma.vmem_to_hbm [thread:$0]  %s178, 128, %s4, [#allocation4]
    $region33: #{tpu_custom_call.1} parent=1 // pred_fallthru
      _
    // Predicated region
    $region34: #{tpu_custom_call.1} parent=1 // pred_check
      _
    $region35: #{tpu_custom_call.1} parent=1 // pred_check_branch
      %182 = sbr.rel (0) target = $region37
    $region36: #{tpu_custom_call.1} parent=1 // pred_region
      %183 = dma.done [#allocation4], 128
    $region37: #{tpu_custom_call.1} parent=1 // pred_fallthru
      _
    %184 = vsyncpa [#allocation3], 1
    %185 = vsyncpa [#allocation6], 1
    %186 = vsyncpa [#allocation4], 1

</llo_original>
